<compile_context>
chip_gen: v7x
topology: tpu7x:2x2x1
jax: 0.10.0
libtpu: 0.0.40
codegen_flags: <defaults>
</compile_context>

<pallas_src>
import functools

import jax
import jax.numpy as jnp
from jax.experimental import pallas as pl
from jax.experimental.pallas import tpu as pltpu

_EPS = 1e-8          # torch.nn.CosineSimilarity default eps
_MARGIN = 0.02
_DEFAULT_TILE_M = 1024   # 2 inputs x 2 pipeline bufs x 1024x512x4B = 8 MiB VMEM
                         # -> fits default scoped VMEM on v5e (16 MiB) / v6e / v7x.


def _per_sample_loss(p_ref, t_ref):
    """Per-sample relu(1 - cos(p, t) - 0.02), shape (tm, 1)."""
    p = p_ref[...].astype(jnp.float32)
    t = t_ref[...].astype(jnp.float32)
    dot = jnp.sum(p * t, axis=1, keepdims=True)        # (tm, 1)
    p_sq = jnp.sum(p * p, axis=1, keepdims=True)       # (tm, 1)
    t_sq = jnp.sum(t * t, axis=1, keepdims=True)       # (tm, 1)
    # torch: cos = dot / max(||p|| * ||t||, eps)
    #      = dot * rsqrt(max(p_sq * t_sq, eps^2))   (rsqrt runs on the EUP slot)
    inv_denom = jax.lax.rsqrt(jnp.maximum(p_sq * t_sq, _EPS * _EPS))
    cos = dot * inv_denom
    return jnp.maximum(1.0 - cos - _MARGIN, 0.0)        # (tm, 1)


def _row_mask(tm, bs):
    """Valid-row mask for the current tile (handles bs % tm != 0 padding)."""
    row = pl.program_id(0) * tm + jax.lax.broadcasted_iota(jnp.int32, (tm, 1), 0)
    return row < bs


def _pack_two_scalars(a, b):
    """Lane-dense (1, 8, 128) tile: sublane 0 = a, sublane 1 = b, rest 0."""
    sub = jax.lax.broadcasted_iota(jnp.int32, (1, 8, 128), 1)
    return jnp.where(sub == 0, a, jnp.where(sub == 1, b, 0.0))


def _identity_loss_kernel(p_ref, t_ref, out_ref, *, bs, tm):
    loss = _per_sample_loss(p_ref, t_ref)                       # (tm, 1)
    loss = jnp.where(_row_mask(tm, bs), loss, 0.0)
    s = jnp.sum(loss)
    c = jnp.sum((loss > 0.0).astype(jnp.float32))
    out_ref[...] = _pack_two_scalars(s, c)


def _identity_loss_weighted_kernel(p_ref, t_ref, w_ref, out_ref, *, bs, tm):
    loss = _per_sample_loss(p_ref, t_ref)                       # (tm, 1)
    mask = _row_mask(tm, bs)
    loss = jnp.where(mask, loss, 0.0)
    w = jnp.where(mask, w_ref[...].astype(jnp.float32), 0.0)    # (tm, 1)
    s = jnp.sum(loss * w)
    sw = jnp.sum(w)
    out_ref[...] = _pack_two_scalars(s, sw)


def identity_loss(predicted, target, weights=None, *, tile_m=_DEFAULT_TILE_M):
    bs, d = predicted.shape
    tm = bs if bs <= tile_m else tile_m
    num_tiles = pl.cdiv(bs, tm)
    padded_bs = num_tiles * tm

    p, t = predicted, target
    if padded_bs != bs:
        pad = ((0, padded_bs - bs), (0, 0))
        p = jnp.pad(p, pad)
        t = jnp.pad(t, pad)

    in_spec = pl.BlockSpec((tm, d), lambda i: (i, 0))
    out_shape = jax.ShapeDtypeStruct((num_tiles, 8, 128), jnp.float32)
    out_spec = pl.BlockSpec((1, 8, 128), lambda i: (i, 0, 0))
    cp = pltpu.CompilerParams(dimension_semantics=("parallel",))

    if weights is None:
        partials = pl.pallas_call(
            functools.partial(_identity_loss_kernel, bs=bs, tm=tm),
            out_shape=out_shape,
            grid=(num_tiles,),
            in_specs=[in_spec, in_spec],
            out_specs=out_spec,
            compiler_params=cp,
        )(p, t)
        s = jnp.sum(partials[:, 0, 0])
        c = jnp.sum(partials[:, 1, 0])
        # count == 0  =>  every loss is exactly 0, so the un-divided sum is returned.
        return jnp.where(c > 0.0, s / jnp.maximum(c, 1.0), s)

    w = weights.reshape(bs, 1).astype(jnp.float32)
    if padded_bs != bs:
        w = jnp.pad(w, ((0, padded_bs - bs), (0, 0)))
    w_spec = pl.BlockSpec((tm, 1), lambda i: (i, 0))
    partials = pl.pallas_call(
        functools.partial(_identity_loss_weighted_kernel, bs=bs, tm=tm),
        out_shape=out_shape,
        grid=(num_tiles,),
        in_specs=[in_spec, in_spec, w_spec],
        out_specs=out_spec,
        compiler_params=cp,
    )(p, t, w)
    s = jnp.sum(partials[:, 0, 0])
    sw = jnp.sum(partials[:, 1, 0])
    return jnp.where(sw == 0.0, s, s / jnp.where(sw == 0.0, 1.0, sw))


def _identity_loss_ref(predicted, target, weights=None):
    p = predicted.astype(jnp.float32)
    t = target.astype(jnp.float32)
    dot = jnp.sum(p * t, axis=1)
    denom = jnp.maximum(jnp.linalg.norm(p, axis=1) * jnp.linalg.norm(t, axis=1), _EPS)
    loss = jnp.maximum(1.0 - dot / denom - _MARGIN, 0.0)
    if weights is None:
        count = jnp.sum((loss > 0.0).astype(jnp.float32))
        return jnp.where(count > 0, jnp.sum(loss) / jnp.maximum(count, 1.0),
                         jnp.sum(loss))
    wloss = loss * weights.astype(jnp.float32)
    sw = jnp.sum(weights.astype(jnp.float32))
    return jnp.where(sw == 0, jnp.sum(wloss),
                     jnp.sum(wloss) / jnp.where(sw == 0, 1.0, sw))


if __name__ == "__main__":
    key = jax.random.PRNGKey(0)
    k1, k2, k3, k4, k5, k6 = jax.random.split(key, 6)

    # Shapes implied by the module docstring: [bs, 512].
    bs, d = 4, 512
    predicted = jax.random.normal(k1, (bs, d), dtype=jnp.float32)
    target = jax.random.normal(k2, (bs, d), dtype=jnp.float32)
    weights = jax.random.uniform(k3, (bs,), dtype=jnp.float32)

    out_u = jax.block_until_ready(identity_loss(predicted, target))
    out_w = jax.block_until_ready(identity_loss(predicted, target, weights))
    out_w0 = jax.block_until_ready(
        identity_loss(predicted, target, jnp.zeros((bs,), jnp.float32)))

    assert jnp.allclose(out_u, _identity_loss_ref(predicted, target),
                        atol=1e-5, rtol=1e-5)
    assert jnp.allclose(out_w, _identity_loss_ref(predicted, target, weights),
                        atol=1e-5, rtol=1e-5)
    assert jnp.allclose(out_w0, _identity_loss_ref(predicted, target,
                                                   jnp.zeros((bs,), jnp.float32)),
                        atol=1e-5, rtol=1e-5)

    # Exercise the tiled / masked path (grid > 1, bs not a multiple of the tile).
    bs2 = 20
    p2 = jax.random.normal(k4, (bs2, d), dtype=jnp.float32)
    t2 = jax.random.normal(k5, (bs2, d), dtype=jnp.float32)
    w2 = jax.random.uniform(k6, (bs2,), dtype=jnp.float32)

    out_u2 = jax.block_until_ready(identity_loss(p2, t2, tile_m=8))
    out_w2 = jax.block_until_ready(identity_loss(p2, t2, w2, tile_m=8))
    assert jnp.allclose(out_u2, _identity_loss_ref(p2, t2), atol=1e-5, rtol=1e-5)
    assert jnp.allclose(out_w2, _identity_loss_ref(p2, t2, w2), atol=1e-5, rtol=1e-5)

    # bf16 inputs ride the same kernel (upcast happens inside the kernel).
    out_bf = jax.block_until_ready(
        identity_loss(p2.astype(jnp.bfloat16), t2.astype(jnp.bfloat16), tile_m=8))
    ref_bf = _identity_loss_ref(p2.astype(jnp.bfloat16), t2.astype(jnp.bfloat16))
    assert jnp.allclose(out_bf, ref_bf, atol=1e-4, rtol=1e-4)

    print("KERNEL_OK")
</pallas_src>

<mosaic_0001>
module attributes {stable_mosaic.version = 11 : i64} {
  func.func @_identity_loss_kernel(%arg0: i32, %arg1: memref<4x512xf32, #tpu.memory_space<vmem>>, %arg2: memref<4x512xf32, #tpu.memory_space<vmem>>, %arg3: memref<1x8x128xf32, #tpu.memory_space<vmem>>) attributes {dimension_semantics = [#tpu.dimension_semantics<parallel>], iteration_bounds = array<i64: 1>, scalar_prefetch = 0 : i64, scratch_operands = 0 : i64, tpu.core_type = #tpu.core_type<tc>, window_params = [{transform_indices = @transform_0, window_bounds = array<i64: 4, 512>}, {transform_indices = @transform_1, window_bounds = array<i64: 4, 512>}, {transform_indices = @transform_2, window_bounds = array<i64: 1, 8, 128>}]} {
    %c0 = arith.constant 0 : index
    %c0_0 = arith.constant 0 : index
    %0 = vector.load %arg1[%c0, %c0_0] : memref<4x512xf32, #tpu.memory_space<vmem>>, vector<4x512xf32>
    %c0_1 = arith.constant 0 : index
    %c0_2 = arith.constant 0 : index
    %1 = vector.load %arg2[%c0_1, %c0_2] : memref<4x512xf32, #tpu.memory_space<vmem>>, vector<4x512xf32>
    %2 = arith.mulf %0, %1 : vector<4x512xf32>
    %cst = arith.constant dense<0.000000e+00> : vector<4xf32>
    %3 = vector.multi_reduction <add>, %2, %cst [1] : vector<4x512xf32> to vector<4xf32>
    %4 = vector.shape_cast %3 : vector<4xf32> to vector<4x1xf32>
    %5 = arith.mulf %0, %0 : vector<4x512xf32>
    %cst_3 = arith.constant dense<0.000000e+00> : vector<4xf32>
    %6 = vector.multi_reduction <add>, %5, %cst_3 [1] : vector<4x512xf32> to vector<4xf32>
    %7 = vector.shape_cast %6 : vector<4xf32> to vector<4x1xf32>
    %8 = arith.mulf %1, %1 : vector<4x512xf32>
    %cst_4 = arith.constant dense<0.000000e+00> : vector<4xf32>
    %9 = vector.multi_reduction <add>, %8, %cst_4 [1] : vector<4x512xf32> to vector<4xf32>
    %10 = vector.shape_cast %9 : vector<4xf32> to vector<4x1xf32>
    %11 = arith.mulf %7, %10 : vector<4x1xf32>
    %cst_5 = arith.constant 1.000000e-16 : f32
    %12 = vector.broadcast %cst_5 : f32 to vector<4x1xf32>
    %13 = arith.maximumf %11, %12 : vector<4x1xf32>
    %14 = math.rsqrt %13 : vector<4x1xf32>
    %15 = arith.mulf %4, %14 : vector<4x1xf32>
    %cst_6 = arith.constant 1.000000e+00 : f32
    %16 = vector.broadcast %cst_6 : f32 to vector<4x1xf32>
    %17 = arith.subf %16, %15 : vector<4x1xf32>
    %cst_7 = arith.constant 2.000000e-02 : f32
    %18 = vector.broadcast %cst_7 : f32 to vector<4x1xf32>
    %19 = arith.subf %17, %18 : vector<4x1xf32>
    %cst_8 = arith.constant 0.000000e+00 : f32
    %20 = vector.broadcast %cst_8 : f32 to vector<4x1xf32>
    %21 = arith.maximumf %19, %20 : vector<4x1xf32>
    %c4_i32 = arith.constant 4 : i32
    %22 = arith.muli %arg0, %c4_i32 : i32
    %23 = tpu.iota {dimensions = array<i32: 0>} : vector<4x1xi32>
    %24 = vector.broadcast %22 : i32 to vector<4x1xi32>
    %25 = arith.addi %24, %23 : vector<4x1xi32>
    %c4_i32_9 = arith.constant 4 : i32
    %26 = vector.broadcast %c4_i32_9 : i32 to vector<4x1xi32>
    %27 = arith.cmpi slt, %25, %26 : vector<4x1xi32>
    %cst_10 = arith.constant 0.000000e+00 : f32
    %28 = vector.broadcast %cst_10 : f32 to vector<4x1xf32>
    %29 = arith.select %27, %21, %28 : vector<4x1xi1>, vector<4x1xf32>
    %30 = vector.shape_cast %29 : vector<4x1xf32> to vector<1x4x1xf32>
    %cst_11 = arith.constant dense<0.000000e+00> : vector<1xf32>
    %31 = vector.multi_reduction <add>, %30, %cst_11 [1, 2] : vector<1x4x1xf32> to vector<1xf32>
    %32 = vector.shape_cast %31 : vector<1xf32> to vector<1x1x1xf32>
    %33 = vector.extract %32[0, 0, 0] : f32 from vector<1x1x1xf32>
    %cst_12 = arith.constant 0.000000e+00 : f32
    %34 = vector.broadcast %cst_12 : f32 to vector<4x1xf32>
    %35 = arith.cmpf ogt, %29, %34 : vector<4x1xf32>
    %36 = arith.extui %35 : vector<4x1xi1> to vector<4x1xi32>
    %37 = arith.sitofp %36 : vector<4x1xi32> to vector<4x1xf32>
    %38 = vector.shape_cast %37 : vector<4x1xf32> to vector<1x4x1xf32>
    %cst_13 = arith.constant dense<0.000000e+00> : vector<1xf32>
    %39 = vector.multi_reduction <add>, %38, %cst_13 [1, 2] : vector<1x4x1xf32> to vector<1xf32>
    %40 = vector.shape_cast %39 : vector<1xf32> to vector<1x1x1xf32>
    %41 = vector.extract %40[0, 0, 0] : f32 from vector<1x1x1xf32>
    %42 = tpu.iota {dimensions = array<i32: 1>} : vector<1x8x128xi32>
    %c0_i32 = arith.constant 0 : i32
    %43 = vector.broadcast %c0_i32 : i32 to vector<1x8x128xi32>
    %44 = arith.cmpi eq, %42, %43 : vector<1x8x128xi32>
    %c1_i32 = arith.constant 1 : i32
    %45 = vector.broadcast %c1_i32 : i32 to vector<1x8x128xi32>
    %46 = arith.cmpi eq, %42, %45 : vector<1x8x128xi32>
    %cst_14 = arith.constant 0.000000e+00 : f32
    %47 = vector.broadcast %41 : f32 to vector<1x8x128xf32>
    %48 = vector.broadcast %cst_14 : f32 to vector<1x8x128xf32>
    %49 = arith.select %46, %47, %48 : vector<1x8x128xi1>, vector<1x8x128xf32>
    %50 = vector.broadcast %33 : f32 to vector<1x8x128xf32>
    %51 = arith.select %44, %50, %49 : vector<1x8x128xi1>, vector<1x8x128xf32>
    %c0_15 = arith.constant 0 : index
    %c0_16 = arith.constant 0 : index
    %c0_17 = arith.constant 0 : index
    %52 = vector.load %arg3[%c0_15, %c0_16, %c0_17] : memref<1x8x128xf32, #tpu.memory_space<vmem>>, vector<1x8x128xf32>
    tpu.vector_store %arg3[%c0_15, %c0_16, %c0_17], %51 {strides = array<i32>} : memref<1x8x128xf32, #tpu.memory_space<vmem>>, vector<1x8x128xf32>,
    return
  }
  func.func @transform_0(%arg0: i32) -> (i32, i32) {
    %c0_i32 = arith.constant 0 : i32
    %c0_i32_0 = arith.constant 0 : i32
    return %arg0, %c0_i32 : i32, i32
  }
  func.func @transform_1(%arg0: i32) -> (i32, i32) {
    %c0_i32 = arith.constant 0 : i32
    %c0_i32_0 = arith.constant 0 : i32
    return %arg0, %c0_i32 : i32, i32
  }
  func.func @transform_2(%arg0: i32) -> (i32, i32, i32) {
    %c0_i32 = arith.constant 0 : i32
    %c0_i32_0 = arith.constant 0 : i32
    %c0_i32_1 = arith.constant 0 : i32
    return %arg0, %c0_i32, %c0_i32_0 : i32, i32, i32
  }
}

</mosaic_0001>

<llo_original>
// kernel: tpu_custom_call.1
$region0: #{tpu_custom_call.1}
  #allocation0 [shape = 'u32[]', space=smem, size = 0x4, offset = 0x4, fixed_abs, tag = 'smem constant byte address 0x4 - core index']
  #allocation1 [shape = 'u32[144,128]{1,0:T(1,128)}', space=vmem, size = 0x12000, scoped, tag = 'internal scratch']
  %s0 = inlined_call_operand.hbm [shape: f32[4,512], index: 0, kind: input, shape index: {}]
  %s1 = inlined_call_operand.hbm [shape: f32[4,512], index: 1, kind: input, shape index: {}]
  %s2 = inlined_call_operand.hbm [shape: f32[1,8,128], index: 2, kind: output, shape index: {}]
  %s3 = sld [smem:[#allocation0]]
  $region26: #{tpu_custom_call.1} parent=0
    _
  %s5 = ssub.s32 1, %s3
  %s6 = scalar_select 0, %s5, %s3
  $region1: #{tpu_custom_call.1} parent=0
    #allocation2 [shape = 'u8[8192]{0}', space=vmem, size = 0x2000, scoped, tag = 'input window, operand 0, single buffered']
    #allocation3 [shape = 's32[1]{0}', space=sflag, size = 0x4, scoped, tag = 'scoped memory for tpu_custom_call.1']
    #allocation4 [shape = 's32[1]{0}', space=sflag, size = 0x4, scoped, tag = 'scoped memory for tpu_custom_call.1']
    #allocation5 [shape = 'u8[8192]{0}', space=vmem, size = 0x2000, scoped, tag = 'input window, operand 1, single buffered']
    #allocation6 [shape = 's32[1]{0}', space=sflag, size = 0x4, scoped, tag = 'scoped memory for tpu_custom_call.1']
    #allocation7 [shape = 'u8[4096]{0}', space=vmem, size = 0x1000, scoped, tag = 'output window, operand 0, single buffered']
    %7 = vsyncpa [#allocation3], 0
    %8 = vsyncpa [#allocation6], 0
    %9 = vsyncpa [#allocation4], 0
    // Predicated region
    $region2: #{tpu_custom_call.1} parent=1 // pred_check
      _
    $region3: #{tpu_custom_call.1} parent=1 // pred_check_branch
      %11 = sbr.rel (0) target = $region5
    $region4: #{tpu_custom_call.1} parent=1 // pred_region
      %s13 = ssub.s32 256, 256
      %14 = vsyncadd [#allocation3], %s13
      %s16 = sshll.u32 [#allocation2], 4
      %s17 = int_to_ptr.vmem [resolvable:$true] %s16
      %19 = dma.hbm_to_vmem [thread:$0]  %s0, 256, %s17, [#allocation3]
    $region5: #{tpu_custom_call.1} parent=1 // pred_fallthru
      _
    // Predicated region
    $region6: #{tpu_custom_call.1} parent=1 // pred_check
      _
    $region7: #{tpu_custom_call.1} parent=1 // pred_check_branch
      %21 = sbr.rel (0) target = $region9
    $region8: #{tpu_custom_call.1} parent=1 // pred_region
      %s23 = ssub.s32 256, 256
      %24 = vsyncadd [#allocation6], %s23
      %s26 = sshll.u32 [#allocation5], 4
      %s27 = int_to_ptr.vmem [resolvable:$true] %s26
      %29 = dma.hbm_to_vmem [thread:$0]  %s1, 256, %s27, [#allocation6]
    $region9: #{tpu_custom_call.1} parent=1 // pred_fallthru
      _
    // Predicated region
    $region10: #{tpu_custom_call.1} parent=1 // pred_check
      _
    $region11: #{tpu_custom_call.1} parent=1 // pred_check_branch
      %31 = sbr.rel (0) target = $region13
    $region12: #{tpu_custom_call.1} parent=1 // pred_region
      %32 = dma.done [#allocation3], 256
    $region13: #{tpu_custom_call.1} parent=1 // pred_fallthru
      _
    // Predicated region
    $region14: #{tpu_custom_call.1} parent=1 // pred_check
      _
    $region15: #{tpu_custom_call.1} parent=1 // pred_check_branch
      %34 = sbr.rel (0) target = $region17
    $region16: #{tpu_custom_call.1} parent=1 // pred_region
      %35 = dma.done [#allocation6], 256
    $region17: #{tpu_custom_call.1} parent=1 // pred_fallthru
      _
    %v36 = vld [vmem:[#allocation2] sm:$0xff]
    %v37 = vld [vmem:[#allocation2 + $0x8] sm:$0xff]
    %v38 = vld [vmem:[#allocation5] sm:$0xff]
    %v39 = vld [vmem:[#allocation5 + $0x8] sm:$0xff]
    %v40 = vmul.f32 %v36, %v38
    %v41 = vmul.f32 %v37, %v39
    %v44 = vcombine.high %v40, %v40
    %v45 = vcombine.high %v41, %v41
    %vm48 = vcmask 1043456
    %v49 = vsel %vm48, %v40, 0.0
    %v50 = vsel %vm48, %v44, 0.0
    %v51 = vadd.f32 %v49, %v50
    %v52 = vsel %vm48, %v41, 0.0
    %v53 = vadd.f32 %v51, %v52
    %v54 = vsel %vm48, %v45, 0.0
    %v55 = vadd.f32 %v53, %v54
    %56 = vadd.xlane.f32.xlu0 %v55
    %v57 = vpop.xlane.xlu0 %56
    %v58 = vmul.f32 %v36, %v36
    %v59 = vmul.f32 %v37, %v37
    %v62 = vcombine.high %v58, %v58
    %v63 = vcombine.high %v59, %v59
    %v66 = vsel %vm48, %v58, 0.0
    %v67 = vsel %vm48, %v62, 0.0
    %v68 = vadd.f32 %v66, %v67
    %v69 = vsel %vm48, %v59, 0.0
    %v70 = vadd.f32 %v68, %v69
    %v71 = vsel %vm48, %v63, 0.0
    %v72 = vadd.f32 %v70, %v71
    %73 = vadd.xlane.f32.xlu0 %v72
    %v74 = vpop.xlane.xlu0 %73
    %v75 = vmul.f32 %v38, %v38
    %v76 = vmul.f32 %v39, %v39
    %v79 = vcombine.high %v75, %v75
    %v80 = vcombine.high %v76, %v76
    %v83 = vsel %vm48, %v75, 0.0
    %v84 = vsel %vm48, %v79, 0.0
    %v85 = vadd.f32 %v83, %v84
    %v86 = vsel %vm48, %v76, 0.0
    %v87 = vadd.f32 %v85, %v86
    %v88 = vsel %vm48, %v80, 0.0
    %v89 = vadd.f32 %v87, %v88
    %90 = vadd.xlane.f32.xlu0 %v89
    %v91 = vpop.xlane.xlu0 %90
    %v92 = vmul.f32 %v74, %v91
    %v93 = vmax.f32 %v92, 1e-16
    %v94 = vrsqrt.pop %v93
    %v95 = vmul.f32 %v57, %v94
    %v96 = vsub.f32 1.0, %v95
    %v97 = vsub.f32 %v96, 0.02
    %v98 = vmax.f32 %v97, 0.0
    %s99 = smul.u32 0, 4
    %v100 = vlaneseq
    %v101 = vshrl.u32 %v100, 7
    %v102 = vstv %s99
    %v103 = vadd.s32 %v102, %v101
    %vm104 = vcmp.lt.s32.totalorder %v103, 4
    %v105 = vsel %vm104, %v98, 0.0
    %vm106 = vcmask 3072
    %v107 = vsel %vm106, %v105, 0.0
    %108 = vadd.xlane.f32.xlu0 %v107
    %v109 = vpop.xlane.xlu0 %108
    %v110 = vrot.slane %v109, 4
    %v111 = vadd.f32 %v109, %v110
    %v112 = vrot.slane %v111, 2
    %v113 = vadd.f32 %v111, %v112
    %v114 = vrot.slane %v113, 1
    %v115 = vadd.f32 %v113, %v114
    %s116 = vtos %v115
    %vm117 = vcmp.gt.f32.partialorder %v105, 0.0
    %v118 = vsel %vm117, 1, 0
    %v119 = vcvt.s32.f32 %v118
    %v120 = vsel %vm106, %v119, 0.0
    %121 = vadd.xlane.f32.xlu0 %v120
    %v122 = vpop.xlane.xlu0 %121
    %v123 = vrot.slane %v122, 4
    %v124 = vadd.f32 %v122, %v123
    %v125 = vrot.slane %v124, 2
    %v126 = vadd.f32 %v124, %v125
    %v127 = vrot.slane %v126, 1
    %v128 = vadd.f32 %v126, %v127
    %s129 = vtos %v128
    %vm130 = vcmp.eq.s32.totalorder %v101, 0
    %vm131 = vcmp.eq.s32.totalorder %v101, 1
    %v132 = vstv %s129
    %v133 = vsel %vm131, %v132, 0.0
    %v134 = vstv %s116
    %v135 = vsel %vm130, %v134, %v133
    %136 = vst [vmem:[#allocation7] sm:$0xff] %v135
    // Predicated region
    $region18: #{tpu_custom_call.1} parent=1 // pred_check
      _
    $region19: #{tpu_custom_call.1} parent=1 // pred_check_branch
      %138 = sbr.rel (0) target = $region21
    $region20: #{tpu_custom_call.1} parent=1 // pred_region
      %s140 = ssub.s32 128, 128
      %141 = vsyncadd [#allocation4], %s140
      %s143 = sshll.u32 [#allocation7], 4
      %s144 = int_to_ptr.vmem [resolvable:$true] %s143
      %146 = dma.vmem_to_hbm [thread:$0]  %s144, 128, %s2, [#allocation4]
    $region21: #{tpu_custom_call.1} parent=1 // pred_fallthru
      _
    // Predicated region
    $region22: #{tpu_custom_call.1} parent=1 // pred_check
      _
    $region23: #{tpu_custom_call.1} parent=1 // pred_check_branch
      %148 = sbr.rel (0) target = $region25
    $region24: #{tpu_custom_call.1} parent=1 // pred_region
      %149 = dma.done [#allocation4], 128
    $region25: #{tpu_custom_call.1} parent=1 // pred_fallthru
      _
    %150 = vsyncpa [#allocation3], 1
    %151 = vsyncpa [#allocation6], 1
    %152 = vsyncpa [#allocation4], 1

</llo_original>
